<compile_context>
chip_gen: v7x
topology: tpu7x:2x2x1
jax: 0.10.0
libtpu: 0.0.40
codegen_flags: <defaults>
</compile_context>

<pallas_src>
import functools

import jax
import jax.numpy as jnp
from jax.experimental import pallas as pl
from jax.experimental.pallas import tpu as pltpu


def _gru_kernel(xb_ref, w_ref, bias_ref, mask_ref, out_ref, *, width):
    # xb_ref:   (1, 1, Ch, HW)  b half of x; channels in sublanes, H*W in lanes
    # w_ref:    (9, 2*Ch, Ch)   fused effective conv weights, tap-major (ky*3+kx)
    # bias_ref: (2*Ch, 1)       fused bias [b_ih[Ch:], b_hh]
    # mask_ref: (3, HW)         column-validity mask for dx = -1, 0, +1
    # out_ref:  (1, 1, Ch, HW)  b' = z * c   (the 'a' half is aliased, untouched)
    ch = xb_ref.shape[2]
    hw = xb_ref.shape[3]
    cout = w_ref.shape[1]

    b = xb_ref[0, 0]                     # (Ch, HW), lane-dense
    colmask = mask_ref[...]              # (3, HW)

    # Accumulate bias + 9 shifted-tap matmuls on the MXU (f32 accumulation).
    acc = jnp.broadcast_to(bias_ref[...], (cout, hw)).astype(jnp.float32)
    for ky in range(3):
        for kx in range(3):
            dy, dx = ky - 1, kx - 1
            s = dy * width + dx          # flat spatial shift for this tap
            if s == 0:
                shifted = b
            elif s > 0:                  # zero-filled shift: out[p] = b[p + s]
                shifted = jnp.concatenate(
                    [b[:, s:], jnp.zeros((ch, s), b.dtype)], axis=1)
            else:
                shifted = jnp.concatenate(
                    [jnp.zeros((ch, -s), b.dtype), b[:, :s]], axis=1)
            if dx != 0:                  # kill row-wrapped values at width borders
                shifted = shifted * colmask[kx:kx + 1, :]
            acc = acc + jnp.dot(w_ref[ky * 3 + kx], shifted,
                                preferred_element_type=jnp.float32)

    z = jax.nn.sigmoid(acc[:ch, :])      # z gate (the r gate is never computed)
    c = jnp.tanh(acc[ch:, :])
    out_ref[0, 0] = (z * c).astype(out_ref.dtype)


def bottleneck_block(x_nchw, w_ih_oihw, b_ih, w_hh_oihw, b_hh):
    """BottleneckBlock forward. x: (N, C, H, W); conv weights in PyTorch OIHW."""
    N, C, H, W = x_nchw.shape
    Ch = C // 2
    HW = H * W

    # Effective fused weights: h == 0 -> drop the hidden input channels; the r
    # gate is discarded -> drop its output channels entirely.
    w_z = w_ih_oihw[Ch:, :Ch]                        # (Ch, Ch, 3, 3)
    w_c = w_hh_oihw[:, :Ch]                          # (Ch, Ch, 3, 3)
    w_f = jnp.concatenate([w_z, w_c], axis=0)        # (2*Ch, Ch, 3, 3)
    w_taps = jnp.transpose(w_f, (2, 3, 0, 1)).reshape(9, 2 * Ch, Ch)
    bias = jnp.concatenate([b_ih[Ch:], b_hh]).reshape(2 * Ch, 1).astype(jnp.float32)

    # Column validity for dx = -1 / 0 / +1 (SAME padding along width); height
    # borders fall out of the zero-filled flat shift inside the kernel.
    col = jnp.arange(HW, dtype=jnp.int32) % W
    colmask = jnp.stack([
        (col >= 1).astype(x_nchw.dtype),
        jnp.ones((HW,), x_nchw.dtype),
        (col <= W - 2).astype(x_nchw.dtype),
    ], axis=0)                                       # (3, HW)

    # Free reshape: NCHW is contiguous, so (N, C, H, W) -> (N, 2, Ch, H*W).
    x4 = x_nchw.reshape(N, 2, Ch, HW)

    kernel = functools.partial(_gru_kernel, width=W)

    # TODO(synk): at production resolutions add an H-row grid axis (1-row halo) +
    # vmem_limit_bytes so tiles fit v7x's 64 MiB VMEM and the spatial axis shards
    # across its two TensorCores; cast matmul operands to bf16 on v6e/v7x once Ch
    # is realistically large.
    out4 = pl.pallas_call(
        kernel,
        out_shape=jax.ShapeDtypeStruct((N, 2, Ch, HW), x_nchw.dtype),
        grid=(N,),
        in_specs=[
            pl.BlockSpec((1, 1, Ch, HW), lambda n: (n, 1, 0, 0)),  # b half only
            pl.BlockSpec((9, 2 * Ch, Ch), lambda n: (0, 0, 0)),
            pl.BlockSpec((2 * Ch, 1), lambda n: (0, 0)),
            pl.BlockSpec((3, HW), lambda n: (0, 0)),
        ],
        out_specs=pl.BlockSpec((1, 1, Ch, HW), lambda n: (n, 1, 0, 0)),  # b' only
        input_output_aliases={0: 0},    # 'a' half passes through untouched in HBM
        compiler_params=pltpu.CompilerParams(dimension_semantics=("parallel",)),
    )(x4, w_taps, bias, colmask)

    return out4.reshape(N, C, H, W)


def reference_nchw(x, w_ih, b_ih, w_hh, b_hh):
    """Pure-JAX reference with the exact PyTorch semantics (h = 0 concatenated)."""
    C = x.shape[1]
    Ch = C // 2
    a = x[:, :Ch]
    b = x[:, Ch:]
    xh = jnp.concatenate([b, jnp.zeros_like(b)], axis=1)
    dn = ("NCHW", "OIHW", "NCHW")
    ih = jax.lax.conv_general_dilated(xh, w_ih, (1, 1), "SAME",
                                      dimension_numbers=dn)
    ih = jax.nn.sigmoid(ih + b_ih[None, :, None, None])
    z = ih[:, Ch:]                       # r = ih[:, :Ch] unused, as in PyTorch
    hh = jax.lax.conv_general_dilated(xh, w_hh, (1, 1), "SAME",
                                      dimension_numbers=dn)
    c = jnp.tanh(hh + b_hh[None, :, None, None])
    return jnp.concatenate([a, z * c], axis=1)


if __name__ == "__main__":
    key = jax.random.PRNGKey(0)
    k1, k2, k3, k4, k5 = jax.random.split(key, 5)

    N, C, H, W = 2, 8, 16, 16            # BottleneckBlock(channels=8) -> ConvGRU(4)
    Ch = C // 2

    # Input and parameters in PyTorch conventions (NCHW / OIHW).
    x = jax.random.normal(k1, (N, C, H, W), dtype=jnp.float32)
    w_ih = jax.random.normal(k2, (2 * Ch, 2 * Ch, 3, 3), jnp.float32) * 0.1
    b_ih = jax.random.normal(k3, (2 * Ch,), jnp.float32) * 0.1
    w_hh = jax.random.normal(k4, (Ch, 2 * Ch, 3, 3), jnp.float32) * 0.1
    b_hh = jax.random.normal(k5, (Ch,), jnp.float32) * 0.1

    ref = jax.block_until_ready(reference_nchw(x, w_ih, b_ih, w_hh, b_hh))

    out = bottleneck_block(x, w_ih, b_ih, w_hh, b_hh)
    out = jax.block_until_ready(out)

    err = float(jnp.max(jnp.abs(out - ref)))
    assert jnp.allclose(out, ref, atol=1e-4, rtol=1e-4), f"max abs err {err}"

    print("KERNEL_OK")
</pallas_src>

<mosaic_0001>
module attributes {stable_mosaic.version = 11 : i64} {
  func.func @_gru_kernel(%arg0: i32, %arg1: memref<1x1x4x256xf32, #tpu.memory_space<vmem>>, %arg2: memref<9x8x4xf32, #tpu.memory_space<vmem>>, %arg3: memref<8x1xf32, #tpu.memory_space<vmem>>, %arg4: memref<3x256xf32, #tpu.memory_space<vmem>>, %arg5: memref<1x1x4x256xf32, #tpu.memory_space<vmem>>) attributes {dimension_semantics = [#tpu.dimension_semantics<parallel>], iteration_bounds = array<i64: 2>, scalar_prefetch = 0 : i64, scratch_operands = 0 : i64, tpu.core_type = #tpu.core_type<tc>, window_params = [{transform_indices = @transform_0, window_bounds = array<i64: 1, 1, 4, 256>}, {pipeline_mode = #tpu.pipeline_mode<synchronous>, transform_indices = @transform_1, window_bounds = array<i64: 9, 8, 4>}, {pipeline_mode = #tpu.pipeline_mode<synchronous>, transform_indices = @transform_2, window_bounds = array<i64: 8, 1>}, {pipeline_mode = #tpu.pipeline_mode<synchronous>, transform_indices = @transform_3, window_bounds = array<i64: 3, 256>}, {transform_indices = @transform_4, window_bounds = array<i64: 1, 1, 4, 256>}]} {
    %c0 = arith.constant 0 : index
    %c0_0 = arith.constant 0 : index
    %c0_1 = arith.constant 0 : index
    %c0_2 = arith.constant 0 : index
    %0 = vector.load %arg1[%c0, %c0_0, %c0_1, %c0_2] : memref<1x1x4x256xf32, #tpu.memory_space<vmem>>, vector<1x1x4x256xf32>
    %1 = vector.shape_cast %0 : vector<1x1x4x256xf32> to vector<4x256xf32>
    %c0_3 = arith.constant 0 : index
    %c0_4 = arith.constant 0 : index
    %2 = vector.load %arg4[%c0_3, %c0_4] : memref<3x256xf32, #tpu.memory_space<vmem>>, vector<3x256xf32>
    %c0_5 = arith.constant 0 : index
    %c0_6 = arith.constant 0 : index
    %3 = vector.load %arg3[%c0_5, %c0_6] : memref<8x1xf32, #tpu.memory_space<vmem>>, vector<8x1xf32>
    %4 = vector.shape_cast %3 : vector<8x1xf32> to vector<8x1xf32>
    %5 = vector.broadcast %4 : vector<8x1xf32> to vector<8x256xf32>
    %cst = arith.constant 0.000000e+00 : f32
    %6 = vector.broadcast %cst : f32 to vector<4x17xf32>
    %7 = vector.extract_strided_slice %1 {offsets = [0, 0], sizes = [4, 239], strides = [1, 1]} : vector<4x256xf32> to vector<4x239xf32>
    %8 = tpu.concatenate %6, %7 in 1 : vector<4x17xf32>, vector<4x239xf32> -> vector<4x256xf32>
    %9 = vector.extract_strided_slice %2 {offsets = [0, 0], sizes = [1, 256], strides = [1, 1]} : vector<3x256xf32> to vector<1x256xf32>
    %10 = vector.broadcast %9 : vector<1x256xf32> to vector<4x256xf32>
    %11 = arith.mulf %8, %10 : vector<4x256xf32>
    %c0_7 = arith.constant 0 : index
    %c0_8 = arith.constant 0 : index
    %c0_9 = arith.constant 0 : index
    %12 = vector.load %arg2[%c0_7, %c0_8, %c0_9] : memref<9x8x4xf32, #tpu.memory_space<vmem>>, vector<1x8x4xf32>
    %13 = vector.shape_cast %12 : vector<1x8x4xf32> to vector<8x4xf32>
    %cst_10 = arith.constant dense<0.000000e+00> : vector<8x256xf32>
    %14 = tpu.matmul %13, %11, %cst_10 {dimension_numbers = #tpu.dot_dimension_numbers<[1], [0], [0], [1], [0, 0, 1, 1], [], []>} : vector<8x4xf32>, vector<4x256xf32>, vector<8x256xf32> -> vector<8x256xf32>
    %15 = arith.addf %5, %14 : vector<8x256xf32>
    %cst_11 = arith.constant 0.000000e+00 : f32
    %16 = vector.broadcast %cst_11 : f32 to vector<4x16xf32>
    %17 = vector.extract_strided_slice %1 {offsets = [0, 0], sizes = [4, 240], strides = [1, 1]} : vector<4x256xf32> to vector<4x240xf32>
    %18 = tpu.concatenate %16, %17 in 1 : vector<4x16xf32>, vector<4x240xf32> -> vector<4x256xf32>
    %c1 = arith.constant 1 : index
    %c0_12 = arith.constant 0 : index
    %c0_13 = arith.constant 0 : index
    %19 = vector.load %arg2[%c1, %c0_12, %c0_13] : memref<9x8x4xf32, #tpu.memory_space<vmem>>, vector<1x8x4xf32>
    %20 = vector.shape_cast %19 : vector<1x8x4xf32> to vector<8x4xf32>
    %cst_14 = arith.constant dense<0.000000e+00> : vector<8x256xf32>
    %21 = tpu.matmul %20, %18, %cst_14 {dimension_numbers = #tpu.dot_dimension_numbers<[1], [0], [0], [1], [0, 0, 1, 1], [], []>} : vector<8x4xf32>, vector<4x256xf32>, vector<8x256xf32> -> vector<8x256xf32>
    %22 = arith.addf %15, %21 : vector<8x256xf32>
    %cst_15 = arith.constant 0.000000e+00 : f32
    %23 = vector.broadcast %cst_15 : f32 to vector<4x15xf32>
    %24 = vector.extract_strided_slice %1 {offsets = [0, 0], sizes = [4, 241], strides = [1, 1]} : vector<4x256xf32> to vector<4x241xf32>
    %25 = tpu.concatenate %23, %24 in 1 : vector<4x15xf32>, vector<4x241xf32> -> vector<4x256xf32>
    %26 = vector.extract_strided_slice %2 {offsets = [2, 0], sizes = [1, 256], strides = [1, 1]} : vector<3x256xf32> to vector<1x256xf32>
    %27 = vector.broadcast %26 : vector<1x256xf32> to vector<4x256xf32>
    %28 = arith.mulf %25, %27 : vector<4x256xf32>
    %c2 = arith.constant 2 : index
    %c0_16 = arith.constant 0 : index
    %c0_17 = arith.constant 0 : index
    %29 = vector.load %arg2[%c2, %c0_16, %c0_17] : memref<9x8x4xf32, #tpu.memory_space<vmem>>, vector<1x8x4xf32>
    %30 = vector.shape_cast %29 : vector<1x8x4xf32> to vector<8x4xf32>
    %cst_18 = arith.constant dense<0.000000e+00> : vector<8x256xf32>
    %31 = tpu.matmul %30, %28, %cst_18 {dimension_numbers = #tpu.dot_dimension_numbers<[1], [0], [0], [1], [0, 0, 1, 1], [], []>} : vector<8x4xf32>, vector<4x256xf32>, vector<8x256xf32> -> vector<8x256xf32>
    %32 = arith.addf %22, %31 : vector<8x256xf32>
    %cst_19 = arith.constant 0.000000e+00 : f32
    %33 = vector.broadcast %cst_19 : f32 to vector<4x1xf32>
    %34 = vector.extract_strided_slice %1 {offsets = [0, 0], sizes = [4, 255], strides = [1, 1]} : vector<4x256xf32> to vector<4x255xf32>
    %35 = tpu.concatenate %33, %34 in 1 : vector<4x1xf32>, vector<4x255xf32> -> vector<4x256xf32>
    %36 = vector.extract_strided_slice %2 {offsets = [0, 0], sizes = [1, 256], strides = [1, 1]} : vector<3x256xf32> to vector<1x256xf32>
    %37 = vector.broadcast %36 : vector<1x256xf32> to vector<4x256xf32>
    %38 = arith.mulf %35, %37 : vector<4x256xf32>
    %c3 = arith.constant 3 : index
    %c0_20 = arith.constant 0 : index
    %c0_21 = arith.constant 0 : index
    %39 = vector.load %arg2[%c3, %c0_20, %c0_21] : memref<9x8x4xf32, #tpu.memory_space<vmem>>, vector<1x8x4xf32>
    %40 = vector.shape_cast %39 : vector<1x8x4xf32> to vector<8x4xf32>
    %cst_22 = arith.constant dense<0.000000e+00> : vector<8x256xf32>
    %41 = tpu.matmul %40, %38, %cst_22 {dimension_numbers = #tpu.dot_dimension_numbers<[1], [0], [0], [1], [0, 0, 1, 1], [], []>} : vector<8x4xf32>, vector<4x256xf32>, vector<8x256xf32> -> vector<8x256xf32>
    %42 = arith.addf %32, %41 : vector<8x256xf32>
    %c4 = arith.constant 4 : index
    %c0_23 = arith.constant 0 : index
    %c0_24 = arith.constant 0 : index
    %43 = vector.load %arg2[%c4, %c0_23, %c0_24] : memref<9x8x4xf32, #tpu.memory_space<vmem>>, vector<1x8x4xf32>
    %44 = vector.shape_cast %43 : vector<1x8x4xf32> to vector<8x4xf32>
    %cst_25 = arith.constant dense<0.000000e+00> : vector<8x256xf32>
    %45 = tpu.matmul %44, %1, %cst_25 {dimension_numbers = #tpu.dot_dimension_numbers<[1], [0], [0], [1], [0, 0, 1, 1], [], []>} : vector<8x4xf32>, vector<4x256xf32>, vector<8x256xf32> -> vector<8x256xf32>
    %46 = arith.addf %42, %45 : vector<8x256xf32>
    %47 = vector.extract_strided_slice %1 {offsets = [0, 1], sizes = [4, 255], strides = [1, 1]} : vector<4x256xf32> to vector<4x255xf32>
    %cst_26 = arith.constant 0.000000e+00 : f32
    %48 = vector.broadcast %cst_26 : f32 to vector<4x1xf32>
    %49 = tpu.concatenate %47, %48 in 1 : vector<4x255xf32>, vector<4x1xf32> -> vector<4x256xf32>
    %50 = vector.extract_strided_slice %2 {offsets = [2, 0], sizes = [1, 256], strides = [1, 1]} : vector<3x256xf32> to vector<1x256xf32>
    %51 = vector.broadcast %50 : vector<1x256xf32> to vector<4x256xf32>
    %52 = arith.mulf %49, %51 : vector<4x256xf32>
    %c5 = arith.constant 5 : index
    %c0_27 = arith.constant 0 : index
    %c0_28 = arith.constant 0 : index
    %53 = vector.load %arg2[%c5, %c0_27, %c0_28] : memref<9x8x4xf32, #tpu.memory_space<vmem>>, vector<1x8x4xf32>
    %54 = vector.shape_cast %53 : vector<1x8x4xf32> to vector<8x4xf32>
    %cst_29 = arith.constant dense<0.000000e+00> : vector<8x256xf32>
    %55 = tpu.matmul %54, %52, %cst_29 {dimension_numbers = #tpu.dot_dimension_numbers<[1], [0], [0], [1], [0, 0, 1, 1], [], []>} : vector<8x4xf32>, vector<4x256xf32>, vector<8x256xf32> -> vector<8x256xf32>
    %56 = arith.addf %46, %55 : vector<8x256xf32>
    %57 = vector.extract_strided_slice %1 {offsets = [0, 15], sizes = [4, 241], strides = [1, 1]} : vector<4x256xf32> to vector<4x241xf32>
    %cst_30 = arith.constant 0.000000e+00 : f32
    %58 = vector.broadcast %cst_30 : f32 to vector<4x15xf32>
    %59 = tpu.concatenate %57, %58 in 1 : vector<4x241xf32>, vector<4x15xf32> -> vector<4x256xf32>
    %60 = vector.extract_strided_slice %2 {offsets = [0, 0], sizes = [1, 256], strides = [1, 1]} : vector<3x256xf32> to vector<1x256xf32>
    %61 = vector.broadcast %60 : vector<1x256xf32> to vector<4x256xf32>
    %62 = arith.mulf %59, %61 : vector<4x256xf32>
    %c6 = arith.constant 6 : index
    %c0_31 = arith.constant 0 : index
    %c0_32 = arith.constant 0 : index
    %63 = vector.load %arg2[%c6, %c0_31, %c0_32] : memref<9x8x4xf32, #tpu.memory_space<vmem>>, vector<1x8x4xf32>
    %64 = vector.shape_cast %63 : vector<1x8x4xf32> to vector<8x4xf32>
    %cst_33 = arith.constant dense<0.000000e+00> : vector<8x256xf32>
    %65 = tpu.matmul %64, %62, %cst_33 {dimension_numbers = #tpu.dot_dimension_numbers<[1], [0], [0], [1], [0, 0, 1, 1], [], []>} : vector<8x4xf32>, vector<4x256xf32>, vector<8x256xf32> -> vector<8x256xf32>
    %66 = arith.addf %56, %65 : vector<8x256xf32>
    %67 = vector.extract_strided_slice %1 {offsets = [0, 16], sizes = [4, 240], strides = [1, 1]} : vector<4x256xf32> to vector<4x240xf32>
    %cst_34 = arith.constant 0.000000e+00 : f32
    %68 = vector.broadcast %cst_34 : f32 to vector<4x16xf32>
    %69 = tpu.concatenate %67, %68 in 1 : vector<4x240xf32>, vector<4x16xf32> -> vector<4x256xf32>
    %c7 = arith.constant 7 : index
    %c0_35 = arith.constant 0 : index
    %c0_36 = arith.constant 0 : index
    %70 = vector.load %arg2[%c7, %c0_35, %c0_36] : memref<9x8x4xf32, #tpu.memory_space<vmem>>, vector<1x8x4xf32>
    %71 = vector.shape_cast %70 : vector<1x8x4xf32> to vector<8x4xf32>
    %cst_37 = arith.constant dense<0.000000e+00> : vector<8x256xf32>
    %72 = tpu.matmul %71, %69, %cst_37 {dimension_numbers = #tpu.dot_dimension_numbers<[1], [0], [0], [1], [0, 0, 1, 1], [], []>} : vector<8x4xf32>, vector<4x256xf32>, vector<8x256xf32> -> vector<8x256xf32>
    %73 = arith.addf %66, %72 : vector<8x256xf32>
    %74 = vector.extract_strided_slice %1 {offsets = [0, 17], sizes = [4, 239], strides = [1, 1]} : vector<4x256xf32> to vector<4x239xf32>
    %cst_38 = arith.constant 0.000000e+00 : f32
    %75 = vector.broadcast %cst_38 : f32 to vector<4x17xf32>
    %76 = tpu.concatenate %74, %75 in 1 : vector<4x239xf32>, vector<4x17xf32> -> vector<4x256xf32>
    %77 = vector.extract_strided_slice %2 {offsets = [2, 0], sizes = [1, 256], strides = [1, 1]} : vector<3x256xf32> to vector<1x256xf32>
    %78 = vector.broadcast %77 : vector<1x256xf32> to vector<4x256xf32>
    %79 = arith.mulf %76, %78 : vector<4x256xf32>
    %c8 = arith.constant 8 : index
    %c0_39 = arith.constant 0 : index
    %c0_40 = arith.constant 0 : index
    %80 = vector.load %arg2[%c8, %c0_39, %c0_40] : memref<9x8x4xf32, #tpu.memory_space<vmem>>, vector<1x8x4xf32>
    %81 = vector.shape_cast %80 : vector<1x8x4xf32> to vector<8x4xf32>
    %cst_41 = arith.constant dense<0.000000e+00> : vector<8x256xf32>
    %82 = tpu.matmul %81, %79, %cst_41 {dimension_numbers = #tpu.dot_dimension_numbers<[1], [0], [0], [1], [0, 0, 1, 1], [], []>} : vector<8x4xf32>, vector<4x256xf32>, vector<8x256xf32> -> vector<8x256xf32>
    %83 = arith.addf %73, %82 : vector<8x256xf32>
    %84 = vector.extract_strided_slice %83 {offsets = [0, 0], sizes = [4, 256], strides = [1, 1]} : vector<8x256xf32> to vector<4x256xf32>
    %85 = arith.negf %84 : vector<4x256xf32>
    %86 = math.exp %85 : vector<4x256xf32>
    %cst_42 = arith.constant 1.000000e+00 : f32
    %87 = vector.broadcast %cst_42 : f32 to vector<4x256xf32>
    %88 = arith.addf %87, %86 : vector<4x256xf32>
    %89 = arith.divf %87, %88 : vector<4x256xf32>
    %90 = vector.extract_strided_slice %83 {offsets = [4, 0], sizes = [4, 256], strides = [1, 1]} : vector<8x256xf32> to vector<4x256xf32>
    %91 = math.tanh %90 : vector<4x256xf32>
    %92 = arith.mulf %89, %91 : vector<4x256xf32>
    %c0_43 = arith.constant 0 : index
    %c0_44 = arith.constant 0 : index
    %c0_45 = arith.constant 0 : index
    %c0_46 = arith.constant 0 : index
    %93 = vector.load %arg5[%c0_43, %c0_44, %c0_45, %c0_46] : memref<1x1x4x256xf32, #tpu.memory_space<vmem>>, vector<1x1x4x256xf32>
    %94 = vector.shape_cast %93 : vector<1x1x4x256xf32> to vector<4x256xf32>
    %95 = vector.shape_cast %92 : vector<4x256xf32> to vector<1x1x4x256xf32>
    tpu.vector_store %arg5[%c0_43, %c0_44, %c0_45, %c0_46], %95 {strides = array<i32>} : memref<1x1x4x256xf32, #tpu.memory_space<vmem>>, vector<1x1x4x256xf32>,
    return
  }
  func.func @transform_0(%arg0: i32) -> (i32, i32, i32, i32) {
    %c1_i32 = arith.constant 1 : i32
    %c0_i32 = arith.constant 0 : i32
    %c0_i32_0 = arith.constant 0 : i32
    %c0_i32_1 = arith.constant 0 : i32
    return %arg0, %c1_i32, %c0_i32, %c0_i32_0 : i32, i32, i32, i32
  }
  func.func @transform_1(%arg0: i32) -> (i32, i32, i32) {
    %c0_i32 = arith.constant 0 : i32
    %c0_i32_0 = arith.constant 0 : i32
    %c0_i32_1 = arith.constant 0 : i32
    %c0_i32_2 = arith.constant 0 : i32
    return %c0_i32, %c0_i32_0, %c0_i32_1 : i32, i32, i32
  }
  func.func @transform_2(%arg0: i32) -> (i32, i32) {
    %c0_i32 = arith.constant 0 : i32
    %c0_i32_0 = arith.constant 0 : i32
    %c0_i32_1 = arith.constant 0 : i32
    return %c0_i32, %c0_i32_0 : i32, i32
  }
  func.func @transform_3(%arg0: i32) -> (i32, i32) {
    %c0_i32 = arith.constant 0 : i32
    %c0_i32_0 = arith.constant 0 : i32
    %c0_i32_1 = arith.constant 0 : i32
    return %c0_i32, %c0_i32_0 : i32, i32
  }
  func.func @transform_4(%arg0: i32) -> (i32, i32, i32, i32) {
    %c1_i32 = arith.constant 1 : i32
    %c0_i32 = arith.constant 0 : i32
    %c0_i32_0 = arith.constant 0 : i32
    %c0_i32_1 = arith.constant 0 : i32
    return %arg0, %c1_i32, %c0_i32, %c0_i32_0 : i32, i32, i32, i32
  }
}

</mosaic_0001>

<llo_original>
// kernel: tpu_custom_call.1
$region0: #{tpu_custom_call.1}
  #allocation0 [shape = 'u32[]', space=smem, size = 0x4, offset = 0x4, fixed_abs, tag = 'smem constant byte address 0x4 - core index']
  #allocation1 [shape = 'u32[144,128]{1,0:T(1,128)}', space=vmem, size = 0x12000, scoped, tag = 'internal scratch']
  %s0 = inlined_call_operand.hbm [shape: f32[2,2,4,256], index: 0, kind: input, shape index: {}, may-alias: {0,4}]
  %s1 = inlined_call_operand.vmem [shape: f32[9,8,4], index: 1, kind: input, shape index: {}]
  %s2 = inlined_call_operand.vmem [shape: f32[8,1], index: 2, kind: input, shape index: {}]
  %s3 = inlined_call_operand.vmem [shape: f32[3,256], index: 3, kind: input, shape index: {}]
  %s4 = inlined_call_operand.hbm [shape: f32[2,2,4,256], index: 4, kind: output, shape index: {}, may-alias: {0,4}]
  %s5 = sld [smem:[#allocation0]]
  $region53: #{tpu_custom_call.1} parent=0
    _
  %s7 = ssub.s32 1, %s5
  %s8 = scalar_select 0, %s7, %s5
  $region1: #{tpu_custom_call.1} parent=0
    #allocation2 [shape = 'u8[8192]{0}', space=vmem, size = 0x2000, scoped, tag = 'input window, operand 0']
    #allocation3 [shape = 's32[2]{0}', space=sflag, size = 0x8, scoped, tag = 'scoped memory for tpu_custom_call.1']
    #allocation4 [shape = 's32[2]{0}', space=sflag, size = 0x8, scoped, tag = 'scoped memory for tpu_custom_call.1']
    #allocation5 [shape = 'u8[8192]{0}', space=vmem, size = 0x2000, scoped, tag = 'output window, operand 0']
    %9 = vsyncpa [#allocation3], 0
    %s10 = scalar_lea.sflag [#allocation3], 1
    %11 = vsyncpa %s10, 0
    %12 = vsyncpa [#allocation4], 0
    %s13 = scalar_lea.sflag [#allocation4], 1
    %14 = vsyncpa %s13, 0
    loop: start=0, step=1, limit=4
    $region2: #{tpu_custom_call.1} parent=1 // loop_pre_header
      _
    $region3: #{tpu_custom_call.1} parent=1 // loop_header
      %s16 = sphi 0, %s20
      %p17 = scmp.ge.s32.totalorder %s16, 4
      %s26 = sphi 0, %s28
      %s29 = sphi 0, %s26
      %s30 = sphi 0, %s29
      %s46 = sphi 0, %s30
      %s50 = sphi 0, %s50
      %s52 = sphi 0, %s50
      %s53 = sphi 0, %s52
      %s67 = sphi 0, %s53
      %s71 = sphi 0, %s71
      %s73 = sphi 0, %s71
      %s74 = sphi 0, %s73
      %s88 = sphi 0, %s74
      %s92 = sphi 0, %s92
      %s94 = sphi 0, %s92
      %s95 = sphi 0, %s94
      %s109 = sphi 0, %s95
      %s115 = sphi 0, %s117
      %s118 = sphi 0, %s115
      %s119 = sphi 0, %s118
      %s135 = sphi 0, %s119
    $region4: #{tpu_custom_call.1} parent=1 // loop_header_branch
      %19 = sbr.rel (%p17) target = $region8
    $region5: #{tpu_custom_call.1} parent=1 // loop_body
      %s21 = ssub.s32 %s16, 1
      %s22 = ssub.s32 %s16, 2
      %s23 = sadd.s32 %s16, 1
      %s24 = ssub.s32 %s16, %s23
      %p25 = scmp.eq.s32.totalorder %s24, 0
      %s27 = sadd.s32 %s26, 1
      %s28 = scalar_select %p25, %s26, %s27
      %p31 = pneg %p25
      %p32 = scmp.eq.s32.totalorder %s16, 1
      %p33 = por %p31, %p32
      %p34 = scmp.ne.s32.totalorder %s26, %s29
      %p35 = scmp.eq.s32.totalorder %s16, 0
      %p36 = por %p34, %p35
      %p37 = scmp.ne.s32.totalorder %s26, %s29
      %p38 = scmp.eq.s32.totalorder %s21, 1
      %p39 = por %p37, %p38
      %p40 = scmp.ne.s32.totalorder %s29, %s30
      %p41 = scmp.eq.s32.totalorder %s21, 0
      %p42 = por %p40, %p41
      %p43 = scmp.ne.s32.totalorder %s29, %s30
      %p44 = scmp.eq.s32.totalorder %s22, 1
      %p45 = por %p43, %p44
      %p47 = scmp.ne.s32.totalorder %s30, %s46
      %p48 = scmp.eq.s32.totalorder %s22, 0
      %p49 = por %p47, %p48
      %s51 = sadd.s32 %s50, 1
      %p54 = scmp.eq.s32.totalorder %s16, 1
      %p55 = scmp.ne.s32.totalorder %s50, %s52
      %p56 = scmp.eq.s32.totalorder %s16, 0
      %p57 = por %p55, %p56
      %p58 = scmp.ne.s32.totalorder %s50, %s52
      %p59 = scmp.eq.s32.totalorder %s21, 1
      %p60 = por %p58, %p59
      %p61 = scmp.ne.s32.totalorder %s52, %s53
      %p62 = scmp.eq.s32.totalorder %s21, 0
      %p63 = por %p61, %p62
      %p64 = scmp.ne.s32.totalorder %s52, %s53
      %p65 = scmp.eq.s32.totalorder %s22, 1
      %p66 = por %p64, %p65
      %p68 = scmp.ne.s32.totalorder %s53, %s67
      %p69 = scmp.eq.s32.totalorder %s22, 0
      %p70 = por %p68, %p69
      %s72 = sadd.s32 %s71, 1
      %p75 = scmp.eq.s32.totalorder %s16, 1
      %p76 = scmp.ne.s32.totalorder %s71, %s73
      %p77 = scmp.eq.s32.totalorder %s16, 0
      %p78 = por %p76, %p77
      %p79 = scmp.ne.s32.totalorder %s71, %s73
      %p80 = scmp.eq.s32.totalorder %s21, 1
      %p81 = por %p79, %p80
      %p82 = scmp.ne.s32.totalorder %s73, %s74
      %p83 = scmp.eq.s32.totalorder %s21, 0
      %p84 = por %p82, %p83
      %p85 = scmp.ne.s32.totalorder %s73, %s74
      %p86 = scmp.eq.s32.totalorder %s22, 1
      %p87 = por %p85, %p86
      %p89 = scmp.ne.s32.totalorder %s74, %s88
      %p90 = scmp.eq.s32.totalorder %s22, 0
      %p91 = por %p89, %p90
      %s93 = sadd.s32 %s92, 1
      %p96 = scmp.eq.s32.totalorder %s16, 1
      %p97 = scmp.ne.s32.totalorder %s92, %s94
      %p98 = scmp.eq.s32.totalorder %s16, 0
      %p99 = por %p97, %p98
      %p100 = scmp.ne.s32.totalorder %s92, %s94
      %p101 = scmp.eq.s32.totalorder %s21, 1
      %p102 = por %p100, %p101
      %p103 = scmp.ne.s32.totalorder %s94, %s95
      %p104 = scmp.eq.s32.totalorder %s21, 0
      %p105 = por %p103, %p104
      %p106 = scmp.ne.s32.totalorder %s94, %s95
      %p107 = scmp.eq.s32.totalorder %s22, 1
      %p108 = por %p106, %p107
      %p110 = scmp.ne.s32.totalorder %s95, %s109
      %p111 = scmp.eq.s32.totalorder %s22, 0
      %p112 = por %p110, %p111
      %s113 = ssub.s32 %s16, %s23
      %p114 = scmp.eq.s32.totalorder %s113, 0
      %s116 = sadd.s32 %s115, 1
      %s117 = scalar_select %p114, %s115, %s116
      %p120 = pneg %p114
      %p121 = scmp.eq.s32.totalorder %s16, 1
      %p122 = por %p120, %p121
      %p123 = scmp.ne.s32.totalorder %s115, %s118
      %p124 = scmp.eq.s32.totalorder %s16, 0
      %p125 = por %p123, %p124
      %p126 = scmp.ne.s32.totalorder %s115, %s118
      %p127 = scmp.eq.s32.totalorder %s21, 1
      %p128 = por %p126, %p127
      %p129 = scmp.ne.s32.totalorder %s118, %s119
      %p130 = scmp.eq.s32.totalorder %s21, 0
      %p131 = por %p129, %p130
      %p132 = scmp.ne.s32.totalorder %s118, %s119
      %p133 = scmp.eq.s32.totalorder %s22, 1
      %p134 = por %p132, %p133
      %p136 = scmp.ne.s32.totalorder %s119, %s135
      %p137 = scmp.eq.s32.totalorder %s22, 0
      %p138 = por %p136, %p137
      %p139 = scmp.le.s32.totalorder 1, %s16
      %p140 = scmp.lt.s32.totalorder %s16, 3
      %p141 = pnand %p139, %p140
      %p142 = pneg %p141
      // Predicated region
      $region9: #{tpu_custom_call.1} parent=5 // pred_check
        _
      $region10: #{tpu_custom_call.1} parent=5 // pred_check_branch
        %144 = sbr.rel (%p141) target = $region12
      $region11: #{tpu_custom_call.1} parent=5 // pred_region
        %s145 = ssub.s32 %s16, 1
        // Predicated region
        $region13: #{tpu_custom_call.1} parent=11 // pred_check
          %p146 = pneg %p63
        $region14: #{tpu_custom_call.1} parent=11 // pred_check_branch
          %148 = sbr.rel (%p146) target = $region16
        $region15: #{tpu_custom_call.1} parent=11 // pred_region
          _
        $region16: #{tpu_custom_call.1} parent=11 // pred_fallthru
          _
        // Predicated region
        $region17: #{tpu_custom_call.1} parent=11 // pred_check
          %p149 = pneg %p84
        $region18: #{tpu_custom_call.1} parent=11 // pred_check_branch
          %151 = sbr.rel (%p149) target = $region20
        $region19: #{tpu_custom_call.1} parent=11 // pred_region
          _
        $region20: #{tpu_custom_call.1} parent=11 // pred_fallthru
          _
        // Predicated region
        $region21: #{tpu_custom_call.1} parent=11 // pred_check
          %p152 = pneg %p105
        $region22: #{tpu_custom_call.1} parent=11 // pred_check_branch
          %154 = sbr.rel (%p152) target = $region24
        $region23: #{tpu_custom_call.1} parent=11 // pred_region
          _
        $region24: #{tpu_custom_call.1} parent=11 // pred_fallthru
          _
      $region12: #{tpu_custom_call.1} parent=5 // pred_fallthru
        _
      %p155 = scmp.lt.s32.totalorder %s16, 2
      // Predicated region
      $region25: #{tpu_custom_call.1} parent=5 // pred_check
        %p156 = pneg %p155
      $region26: #{tpu_custom_call.1} parent=5 // pred_check_branch
        %158 = sbr.rel (%p156) target = $region28
      $region27: #{tpu_custom_call.1} parent=5 // pred_region
        // Predicated region
        $region29: #{tpu_custom_call.1} parent=27 // pred_check
          %p159 = pneg %p36
        $region30: #{tpu_custom_call.1} parent=27 // pred_check_branch
          %161 = sbr.rel (%p159) target = $region32
        $region31: #{tpu_custom_call.1} parent=27 // pred_region
          %s162 = sand.u32 %s26, 1
          %s163 = scalar_lea.sflag [#allocation3], %s162
          %s164 = sand.u32 %s26, 1
          %s165 = smul.addr %s164, 8
          %s166 = scalar_lea.vmem [#allocation2], %s165
          %s168 = ssub.s32 128, 128
          %169 = vsyncadd %s163, %s168
          %s170 = smul.addr %s16, 4
          %s171 = sadd.s32 2, %s170
          %s172 = smul.addr %s171, 64
          %s173 = scalar_lea.hbm %s0, %s172
          %s175 = sshll.u32 %s166, 4
          %s176 = int_to_ptr.vmem [resolvable:$true] %s175
          %178 = dma.hbm_to_vmem [thread:$0]  %s173, 128, %s176, %s163
        $region32: #{tpu_custom_call.1} parent=27 // pred_fallthru
          _
      $region28: #{tpu_custom_call.1} parent=5 // pred_fallthru
        _
      %p179 = scmp.le.s32.totalorder 1, %s16
      %p180 = scmp.lt.s32.totalorder %s16, 3
      %p181 = pnand %p179, %p180
      %p182 = pneg %p181
      // Predicated region
      $region33: #{tpu_custom_call.1} parent=5 // pred_check
        _
      $region34: #{tpu_custom_call.1} parent=5 // pred_check_branch
        %184 = sbr.rel (%p181) target = $region36
      $region35: #{tpu_custom_call.1} parent=5 // pred_region
        %s185 = ssub.s32 %s16, 1
        %s186 = sand.u32 %s29, 1
        %s187 = scalar_lea.sflag [#allocation3], %s186
        %s188 = sand.u32 %s29, 1
        %s189 = smul.addr %s188, 8
        %s190 = scalar_lea.vmem [#allocation2], %s189
        // Predicated region
        $region37: #{tpu_custom_call.1} parent=35 // pred_check
          %p191 = pneg %p42
        $region38: #{tpu_custom_call.1} parent=35 // pred_check_branch
          %193 = sbr.rel (%p191) target = $region40
        $region39: #{tpu_custom_call.1} parent=35 // pred_region
          %194 = dma.done %s187, 128
        $region40: #{tpu_custom_call.1} parent=35 // pred_fallthru
          _
        %s195 = sand.u32 %s29, 1
        %s196 = scalar_lea.sflag [#allocation3], %s195
        %s197 = sand.u32 %s29, 1
        %s198 = smul.addr %s197, 8
        %s199 = scalar_lea.vmem [#allocation2], %s198
        %p200 = pneg %p42
        %p201 = pneg %p39
        %p202 = pneg %p63
        %p203 = pneg %p60
        %p204 = pneg %p84
        %p205 = pneg %p81
        %p206 = pneg %p105
        %p207 = pneg %p102
        %p208 = pneg %p131
        %p209 = pneg %p128
        %s210 = sand.u32 %s118, 1
        %s211 = scalar_lea.sflag [#allocation4], %s210
        %s212 = sand.u32 %s118, 1
        %s213 = smul.addr %s212, 8
        %s214 = scalar_lea.vmem [#allocation5], %s213
        %v215 = vld [vmem:[%s190] sm:$0xff]
        %v216 = vld [vmem:[%s3] sm:$0x77]
        %v217 = vld [vmem:[%s2] sm:$0xff]
        %219 = vset.pattern.permute.xlu0 0
        %220 = vperm.xlu0 %219, %v217
        %v221 = vpop.permute.xlu0 %220
        %v224 = vcombine.high %v215, %v215
        %225 = vrot.lane.b32.xlu0 %v215, 17
        %v226 = vpop.permute.xlu0 %225
        %227 = vrot.lane.b32.xlu0 %v224, 17
        %v228 = vpop.permute.xlu0 %227
        %vm229 = vcmask 138240
        %v230 = vsel %vm229, %v226, %v228
        %v233 = vsel %vm229, 0.0, %v226
        %v235 = vlaneseq
        %v236 = vshrl.u32 %v235, 7
        %v237 = vsub.s32 0, %v236
        %v238 = vrot.slane %v216, %v237
        %v239 = vlaneseq
        %v240 = vshrl.u32 %v239, 7
        %v241 = vsub.s32 4, %v240
        %v242 = vrot.slane %v216, %v241
        %v245 = vlaneseq
        %v246 = vshrl.u32 %v245, 7
        %v247 = vsub.s32 0, %v246
        %v248 = vrot.slane %v238, %v247
        %v249 = vlaneseq
        %v250 = vshrl.u32 %v249, 7
        %v251 = vsub.s32 0, %v250
        %v252 = vrot.slane %v242, %v251
        %v253 = vmul.f32 %v233, %v248
        %v254 = vmul.f32 %v230, %v252
        %v255 = vld [vmem:[%s1] sm:$0xff]
        %vm256 = vcmask 31744
        %v258 = vsel %vm256, %v255, 0
        %vm260 = vcmask 1043456
        %v262 = vsel %vm260, %v253, 0
        %v265 = vsel %vm260, %v254, 0
        %267 = vmatprep.subr.mxu0 %v265
        %268 = vmatpush1.msra.mxu0 %v262
        %269 = vmatprep.subr.mxu0 0.0
        %270 = vmatpush1.msra.mxu0 0.0
        %271 = vmatprep.subr.mxu0 0.0
        %272 = vmatpush1.msra.mxu0 0.0
        %273 = vmatprep.subr.mxu0 0.0
        %274 = vmatpush1.msra.mxu0 0.0
        %275 = vmatprep.subr.mxu0 0.0
        %276 = vmatpush1.msra.mxu0 0.0
        %277 = vmatprep.subr.mxu0 0.0
        %278 = vmatpush1.msra.mxu0 0.0
        %279 = vmatprep.subr.mxu0 0.0
        %280 = vmatpush1.msra.mxu0 0.0
        %281 = vmatprep.subr.mxu0 0.0
        %282 = vmatpush1.msra.mxu0 0.0
        %283 = vmatprep.subr.mxu0 0.0
        %284 = vmatpush1.msra.mxu0 0.0
        %285 = vmatprep.subr.mxu0 0.0
        %286 = vmatpush1.msra.mxu0 0.0
        %287 = vmatprep.subr.mxu0 0.0
        %288 = vmatpush1.msra.mxu0 0.0
        %289 = vmatprep.subr.mxu0 0.0
        %290 = vmatpush1.msra.mxu0 0.0
        %291 = vmatprep.subr.mxu0 0.0
        %292 = vmatpush1.msra.mxu0 0.0
        %293 = vmatprep.subr.mxu0 0.0
        %294 = vmatpush1.msra.mxu0 0.0
        %295 = vmatprep.subr.mxu0 0.0
        %296 = vmatpush1.msra.mxu0 0.0
        %297 = vmatprep.subr.mxu0 0.0
        %298 = vmatpush1.msra.mxu0 0.0
        %299 = vmatprep.subr.mxu0 0.0
        %300 = vmatpush1.msra.mxu0 0.0
        %301 = vmatprep.subr.mxu0 0.0
        %302 = vmatpush1.msra.mxu0 0.0
        %303 = vmatprep.subr.mxu0 0.0
        %304 = vmatpush1.msra.mxu0 0.0
        %305 = vmatprep.subr.mxu0 0.0
        %306 = vmatpush1.msra.mxu0 0.0
        %307 = vmatprep.subr.mxu0 0.0
        %308 = vmatpush1.msra.mxu0 0.0
        %309 = vmatprep.subr.mxu0 0.0
        %310 = vmatpush1.msra.mxu0 0.0
        %311 = vmatprep.subr.mxu0 0.0
        %312 = vmatpush1.msra.mxu0 0.0
        %313 = vmatprep.subr.mxu0 0.0
        %314 = vmatpush1.msra.mxu0 0.0
        %315 = vmatprep.subr.mxu0 0.0
        %316 = vmatpush1.msra.mxu0 0.0
        %317 = vmatprep.subr.mxu0 0.0
        %318 = vmatpush1.msra.mxu0 0.0
        %319 = vmatprep.subr.mxu0 0.0
        %320 = vmatpush1.msra.mxu0 0.0
        %321 = vmatprep.subr.mxu0 0.0
        %322 = vmatpush1.msra.mxu0 0.0
        %323 = vmatprep.subr.mxu0 0.0
        %324 = vmatpush1.msra.mxu0 0.0
        %325 = vmatprep.subr.mxu0 0.0
        %326 = vmatpush1.msra.mxu0 0.0
        %327 = vmatprep.subr.mxu0 0.0
        %328 = vmatpush1.msra.mxu0 0.0
        %329 = vmatprep.subr.mxu0 0.0
        %330 = vmatpush1.msra.mxu0 0.0
        %331 = vmatprep.mubr.f32.mxu0 0.0
        %332 = vmatmul.mubr.f32.gmra.mrb[0].mxu0 %v258
        %v333 = vpop.f32.mrb[0].mxu0
        %v334 = vadd.f32 0.0, %v333
        %v335 = vpop.f32.mrb[0].mxu0
        %v336 = vadd.f32 0.0, %v335
        %337 = vdwg.mxu0
        %v338 = vadd.f32 %v221, %v334
        %v339 = vadd.f32 %v221, %v336
        %340 = vrot.lane.b32.xlu0 %v215, 16
        %v341 = vpop.permute.xlu0 %340
        %342 = vrot.lane.b32.xlu0 %v224, 16
        %v343 = vpop.permute.xlu0 %342
        %vm344 = vcmask 130048
        %v345 = vsel %vm344, %v341, %v343
        %v347 = vsel %vm344, 0.0, %v341
        %s348 = scalar_lea.vmem %s1, 8
        %v349 = vld [vmem:[%s348] sm:$0xff]
        %v351 = vsel %vm256, %v349, 0
        %v354 = vsel %vm260, %v347, 0
        %v356 = vsel %vm260, %v345, 0
        %358 = vmatprep.subr.mxu0 %v356
        %359 = vmatpush1.msra.mxu0 %v354
        %360 = vmatprep.subr.mxu0 0.0
        %361 = vmatpush1.msra.mxu0 0.0
        %362 = vmatprep.subr.mxu0 0.0
        %363 = vmatpush1.msra.mxu0 0.0
        %364 = vmatprep.subr.mxu0 0.0
        %365 = vmatpush1.msra.mxu0 0.0
        %366 = vmatprep.subr.mxu0 0.0
        %367 = vmatpush1.msra.mxu0 0.0
        %368 = vmatprep.subr.mxu0 0.0
        %369 = vmatpush1.msra.mxu0 0.0
        %370 = vmatprep.subr.mxu0 0.0
        %371 = vmatpush1.msra.mxu0 0.0
        %372 = vmatprep.subr.mxu0 0.0
        %373 = vmatpush1.msra.mxu0 0.0
        %374 = vmatprep.subr.mxu0 0.0
        %375 = vmatpush1.msra.mxu0 0.0
        %376 = vmatprep.subr.mxu0 0.0
        %377 = vmatpush1.msra.mxu0 0.0
        %378 = vmatprep.subr.mxu0 0.0
        %379 = vmatpush1.msra.mxu0 0.0
        %380 = vmatprep.subr.mxu0 0.0
        %381 = vmatpush1.msra.mxu0 0.0
        %382 = vmatprep.subr.mxu0 0.0
        %383 = vmatpush1.msra.mxu0 0.0
        %384 = vmatprep.subr.mxu0 0.0
        %385 = vmatpush1.msra.mxu0 0.0
        %386 = vmatprep.subr.mxu0 0.0
        %387 = vmatpush1.msra.mxu0 0.0
        %388 = vmatprep.subr.mxu0 0.0
        %389 = vmatpush1.msra.mxu0 0.0
        %390 = vmatprep.subr.mxu0 0.0
        %391 = vmatpush1.msra.mxu0 0.0
        %392 = vmatprep.subr.mxu0 0.0
        %393 = vmatpush1.msra.mxu0 0.0
        %394 = vmatprep.subr.mxu0 0.0
        %395 = vmatpush1.msra.mxu0 0.0
        %396 = vmatprep.subr.mxu0 0.0
        %397 = vmatpush1.msra.mxu0 0.0
        %398 = vmatprep.subr.mxu0 0.0
        %399 = vmatpush1.msra.mxu0 0.0
        %400 = vmatprep.subr.mxu0 0.0
        %401 = vmatpush1.msra.mxu0 0.0
        %402 = vmatprep.subr.mxu0 0.0
        %403 = vmatpush1.msra.mxu0 0.0
        %404 = vmatprep.subr.mxu0 0.0
        %405 = vmatpush1.msra.mxu0 0.0
        %406 = vmatprep.subr.mxu0 0.0
        %407 = vmatpush1.msra.mxu0 0.0
        %408 = vmatprep.subr.mxu0 0.0
        %409 = vmatpush1.msra.mxu0 0.0
        %410 = vmatprep.subr.mxu0 0.0
        %411 = vmatpush1.msra.mxu0 0.0
        %412 = vmatprep.subr.mxu0 0.0
        %413 = vmatpush1.msra.mxu0 0.0
        %414 = vmatprep.subr.mxu0 0.0
        %415 = vmatpush1.msra.mxu0 0.0
        %416 = vmatprep.subr.mxu0 0.0
        %417 = vmatpush1.msra.mxu0 0.0
        %418 = vmatprep.subr.mxu0 0.0
        %419 = vmatpush1.msra.mxu0 0.0
        %420 = vmatprep.subr.mxu0 0.0
        %421 = vmatpush1.msra.mxu0 0.0
        %422 = vmatprep.mubr.f32.mxu0 0.0
        %423 = vmatmul.mubr.f32.gmra.mrb[0].mxu0 %v351
        %v424 = vpop.f32.mrb[0].mxu0
        %v425 = vadd.f32 0.0, %v424
        %v426 = vpop.f32.mrb[0].mxu0
        %v427 = vadd.f32 0.0, %v426
        %428 = vdwg.mxu0
        %v429 = vadd.f32 %v338, %v425
        %v430 = vadd.f32 %v339, %v427
        %431 = vrot.lane.b32.xlu0 %v215, 15
        %v432 = vpop.permute.xlu0 %431
        %433 = vrot.lane.b32.xlu0 %v224, 15
        %v434 = vpop.permute.xlu0 %433
        %vm435 = vcmask 121856
        %v436 = vsel %vm435, %v432, %v434
        %v439 = vsel %vm435, 0.0, %v432
        %v440 = vlaneseq
        %v441 = vshrl.u32 %v440, 7
        %v442 = vsub.s32 2, %v441
        %v443 = vrot.slane %v216, %v442
        %v444 = vlaneseq
        %v445 = vshrl.u32 %v444, 7
        %v446 = vsub.s32 6, %v445
        %v447 = vrot.slane %v216, %v446
        %v450 = vlaneseq
        %v451 = vshrl.u32 %v450, 7
        %v452 = vsub.s32 2, %v451
        %v453 = vrot.slane %v443, %v452
        %v454 = vlaneseq
        %v455 = vshrl.u32 %v454, 7
        %v456 = vsub.s32 2, %v455
        %v457 = vrot.slane %v447, %v456
        %v458 = vmul.f32 %v439, %v453
        %v459 = vmul.f32 %v436, %v457
        %s460 = scalar_lea.vmem %s1, 16
        %v461 = vld [vmem:[%s460] sm:$0xff]
        %v463 = vsel %vm256, %v461, 0
        %v466 = vsel %vm260, %v458, 0
        %v469 = vsel %vm260, %v459, 0
        %471 = vmatprep.subr.mxu0 %v469
        %472 = vmatpush1.msra.mxu0 %v466
        %473 = vmatprep.subr.mxu0 0.0
        %474 = vmatpush1.msra.mxu0 0.0
        %475 = vmatprep.subr.mxu0 0.0
        %476 = vmatpush1.msra.mxu0 0.0
        %477 = vmatprep.subr.mxu0 0.0
        %478 = vmatpush1.msra.mxu0 0.0
        %479 = vmatprep.subr.mxu0 0.0
        %480 = vmatpush1.msra.mxu0 0.0
        %481 = vmatprep.subr.mxu0 0.0
        %482 = vmatpush1.msra.mxu0 0.0
        %483 = vmatprep.subr.mxu0 0.0
        %484 = vmatpush1.msra.mxu0 0.0
        %485 = vmatprep.subr.mxu0 0.0
        %486 = vmatpush1.msra.mxu0 0.0
        %487 = vmatprep.subr.mxu0 0.0
        %488 = vmatpush1.msra.mxu0 0.0
        %489 = vmatprep.subr.mxu0 0.0
        %490 = vmatpush1.msra.mxu0 0.0
        %491 = vmatprep.subr.mxu0 0.0
        %492 = vmatpush1.msra.mxu0 0.0
        %493 = vmatprep.subr.mxu0 0.0
        %494 = vmatpush1.msra.mxu0 0.0
        %495 = vmatprep.subr.mxu0 0.0
        %496 = vmatpush1.msra.mxu0 0.0
        %497 = vmatprep.subr.mxu0 0.0
        %498 = vmatpush1.msra.mxu0 0.0
        %499 = vmatprep.subr.mxu0 0.0
        %500 = vmatpush1.msra.mxu0 0.0
        %501 = vmatprep.subr.mxu0 0.0
        %502 = vmatpush1.msra.mxu0 0.0
        %503 = vmatprep.subr.mxu0 0.0
        %504 = vmatpush1.msra.mxu0 0.0
        %505 = vmatprep.subr.mxu0 0.0
        %506 = vmatpush1.msra.mxu0 0.0
        %507 = vmatprep.subr.mxu0 0.0
        %508 = vmatpush1.msra.mxu0 0.0
        %509 = vmatprep.subr.mxu0 0.0
        %510 = vmatpush1.msra.mxu0 0.0
        %511 = vmatprep.subr.mxu0 0.0
        %512 = vmatpush1.msra.mxu0 0.0
        %513 = vmatprep.subr.mxu0 0.0
        %514 = vmatpush1.msra.mxu0 0.0
        %515 = vmatprep.subr.mxu0 0.0
        %516 = vmatpush1.msra.mxu0 0.0
        %517 = vmatprep.subr.mxu0 0.0
        %518 = vmatpush1.msra.mxu0 0.0
        %519 = vmatprep.subr.mxu0 0.0
        %520 = vmatpush1.msra.mxu0 0.0
        %521 = vmatprep.subr.mxu0 0.0
        %522 = vmatpush1.msra.mxu0 0.0
        %523 = vmatprep.subr.mxu0 0.0
        %524 = vmatpush1.msra.mxu0 0.0
        %525 = vmatprep.subr.mxu0 0.0
        %526 = vmatpush1.msra.mxu0 0.0
        %527 = vmatprep.subr.mxu0 0.0
        %528 = vmatpush1.msra.mxu0 0.0
        %529 = vmatprep.subr.mxu0 0.0
        %530 = vmatpush1.msra.mxu0 0.0
        %531 = vmatprep.subr.mxu0 0.0
        %532 = vmatpush1.msra.mxu0 0.0
        %533 = vmatprep.subr.mxu0 0.0
        %534 = vmatpush1.msra.mxu0 0.0
        %535 = vmatprep.mubr.f32.mxu0 0.0
        %536 = vmatmul.mubr.f32.gmra.mrb[0].mxu0 %v463
        %v537 = vpop.f32.mrb[0].mxu0
        %v538 = vadd.f32 0.0, %v537
        %v539 = vpop.f32.mrb[0].mxu0
        %v540 = vadd.f32 0.0, %v539
        %541 = vdwg.mxu0
        %v542 = vadd.f32 %v429, %v538
        %v543 = vadd.f32 %v430, %v540
        %544 = vrot.lane.b32.xlu0 %v215, 1
        %v545 = vpop.permute.xlu0 %544
        %546 = vrot.lane.b32.xlu0 %v224, 1
        %v547 = vpop.permute.xlu0 %546
        %vm548 = vcmask 7168
        %v549 = vsel %vm548, %v545, %v547
        %v552 = vsel %vm548, 0.0, %v545
        %v553 = vmul.f32 %v552, %v248
        %v554 = vmul.f32 %v549, %v252
        %s555 = scalar_lea.vmem %s1, 24
        %v556 = vld [vmem:[%s555] sm:$0xff]
        %v558 = vsel %vm256, %v556, 0
        %v561 = vsel %vm260, %v553, 0
        %v564 = vsel %vm260, %v554, 0
        %566 = vmatprep.subr.mxu0 %v564
        %567 = vmatpush1.msra.mxu0 %v561
        %568 = vmatprep.subr.mxu0 0.0
        %569 = vmatpush1.msra.mxu0 0.0
        %570 = vmatprep.subr.mxu0 0.0
        %571 = vmatpush1.msra.mxu0 0.0
        %572 = vmatprep.subr.mxu0 0.0
        %573 = vmatpush1.msra.mxu0 0.0
        %574 = vmatprep.subr.mxu0 0.0
        %575 = vmatpush1.msra.mxu0 0.0
        %576 = vmatprep.subr.mxu0 0.0
        %577 = vmatpush1.msra.mxu0 0.0
        %578 = vmatprep.subr.mxu0 0.0
        %579 = vmatpush1.msra.mxu0 0.0
        %580 = vmatprep.subr.mxu0 0.0
        %581 = vmatpush1.msra.mxu0 0.0
        %582 = vmatprep.subr.mxu0 0.0
        %583 = vmatpush1.msra.mxu0 0.0
        %584 = vmatprep.subr.mxu0 0.0
        %585 = vmatpush1.msra.mxu0 0.0
        %586 = vmatprep.subr.mxu0 0.0
        %587 = vmatpush1.msra.mxu0 0.0
        %588 = vmatprep.subr.mxu0 0.0
        %589 = vmatpush1.msra.mxu0 0.0
        %590 = vmatprep.subr.mxu0 0.0
        %591 = vmatpush1.msra.mxu0 0.0
        %592 = vmatprep.subr.mxu0 0.0
        %593 = vmatpush1.msra.mxu0 0.0
        %594 = vmatprep.subr.mxu0 0.0
        %595 = vmatpush1.msra.mxu0 0.0
        %596 = vmatprep.subr.mxu0 0.0
        %597 = vmatpush1.msra.mxu0 0.0
        %598 = vmatprep.subr.mxu0 0.0
        %599 = vmatpush1.msra.mxu0 0.0
        %600 = vmatprep.subr.mxu0 0.0
        %601 = vmatpush1.msra.mxu0 0.0
        %602 = vmatprep.subr.mxu0 0.0
        %603 = vmatpush1.msra.mxu0 0.0
        %604 = vmatprep.subr.mxu0 0.0
        %605 = vmatpush1.msra.mxu0 0.0
        %606 = vmatprep.subr.mxu0 0.0
        %607 = vmatpush1.msra.mxu0 0.0
        %608 = vmatprep.subr.mxu0 0.0
        %609 = vmatpush1.msra.mxu0 0.0
        %610 = vmatprep.subr.mxu0 0.0
        %611 = vmatpush1.msra.mxu0 0.0
        %612 = vmatprep.subr.mxu0 0.0
        %613 = vmatpush1.msra.mxu0 0.0
        %614 = vmatprep.subr.mxu0 0.0
        %615 = vmatpush1.msra.mxu0 0.0
        %616 = vmatprep.subr.mxu0 0.0
        %617 = vmatpush1.msra.mxu0 0.0
        %618 = vmatprep.subr.mxu0 0.0
        %619 = vmatpush1.msra.mxu0 0.0
        %620 = vmatprep.subr.mxu0 0.0
        %621 = vmatpush1.msra.mxu0 0.0
        %622 = vmatprep.subr.mxu0 0.0
        %623 = vmatpush1.msra.mxu0 0.0
        %624 = vmatprep.subr.mxu0 0.0
        %625 = vmatpush1.msra.mxu0 0.0
        %626 = vmatprep.subr.mxu0 0.0
        %627 = vmatpush1.msra.mxu0 0.0
        %628 = vmatprep.subr.mxu0 0.0
        %629 = vmatpush1.msra.mxu0 0.0
        %630 = vmatprep.mubr.f32.mxu0 0.0
        %631 = vmatmul.mubr.f32.gmra.mrb[0].mxu0 %v558
        %v632 = vpop.f32.mrb[0].mxu0
        %v633 = vadd.f32 0.0, %v632
        %v634 = vpop.f32.mrb[0].mxu0
        %v635 = vadd.f32 0.0, %v634
        %636 = vdwg.mxu0
        %v637 = vadd.f32 %v542, %v633
        %v638 = vadd.f32 %v543, %v635
        %s639 = scalar_lea.vmem %s1, 32
        %v640 = vld [vmem:[%s639] sm:$0xff]
        %v642 = vsel %vm256, %v640, 0
        %v644 = vsel %vm260, %v215, 0
        %v646 = vsel %vm260, %v224, 0
        %648 = vmatprep.subr.mxu0 %v646
        %649 = vmatpush1.msra.mxu0 %v644
        %650 = vmatprep.subr.mxu0 0.0
        %651 = vmatpush1.msra.mxu0 0.0
        %652 = vmatprep.subr.mxu0 0.0
        %653 = vmatpush1.msra.mxu0 0.0
        %654 = vmatprep.subr.mxu0 0.0
        %655 = vmatpush1.msra.mxu0 0.0
        %656 = vmatprep.subr.mxu0 0.0
        %657 = vmatpush1.msra.mxu0 0.0
        %658 = vmatprep.subr.mxu0 0.0
        %659 = vmatpush1.msra.mxu0 0.0
        %660 = vmatprep.subr.mxu0 0.0
        %661 = vmatpush1.msra.mxu0 0.0
        %662 = vmatprep.subr.mxu0 0.0
        %663 = vmatpush1.msra.mxu0 0.0
        %664 = vmatprep.subr.mxu0 0.0
        %665 = vmatpush1.msra.mxu0 0.0
        %666 = vmatprep.subr.mxu0 0.0
        %667 = vmatpush1.msra.mxu0 0.0
        %668 = vmatprep.subr.mxu0 0.0
        %669 = vmatpush1.msra.mxu0 0.0
        %670 = vmatprep.subr.mxu0 0.0
        %671 = vmatpush1.msra.mxu0 0.0
        %672 = vmatprep.subr.mxu0 0.0
        %673 = vmatpush1.msra.mxu0 0.0
        %674 = vmatprep.subr.mxu0 0.0
        %675 = vmatpush1.msra.mxu0 0.0
        %676 = vmatprep.subr.mxu0 0.0
        %677 = vmatpush1.msra.mxu0 0.0
        %678 = vmatprep.subr.mxu0 0.0
        %679 = vmatpush1.msra.mxu0 0.0
        %680 = vmatprep.subr.mxu0 0.0
        %681 = vmatpush1.msra.mxu0 0.0
        %682 = vmatprep.subr.mxu0 0.0
        %683 = vmatpush1.msra.mxu0 0.0
        %684 = vmatprep.subr.mxu0 0.0
        %685 = vmatpush1.msra.mxu0 0.0
        %686 = vmatprep.subr.mxu0 0.0
        %687 = vmatpush1.msra.mxu0 0.0
        %688 = vmatprep.subr.mxu0 0.0
        %689 = vmatpush1.msra.mxu0 0.0
        %690 = vmatprep.subr.mxu0 0.0
        %691 = vmatpush1.msra.mxu0 0.0
        %692 = vmatprep.subr.mxu0 0.0
        %693 = vmatpush1.msra.mxu0 0.0
        %694 = vmatprep.subr.mxu0 0.0
        %695 = vmatpush1.msra.mxu0 0.0
        %696 = vmatprep.subr.mxu0 0.0
        %697 = vmatpush1.msra.mxu0 0.0
        %698 = vmatprep.subr.mxu0 0.0
        %699 = vmatpush1.msra.mxu0 0.0
        %700 = vmatprep.subr.mxu0 0.0
        %701 = vmatpush1.msra.mxu0 0.0
        %702 = vmatprep.subr.mxu0 0.0
        %703 = vmatpush1.msra.mxu0 0.0
        %704 = vmatprep.subr.mxu0 0.0
        %705 = vmatpush1.msra.mxu0 0.0
        %706 = vmatprep.subr.mxu0 0.0
        %707 = vmatpush1.msra.mxu0 0.0
        %708 = vmatprep.subr.mxu0 0.0
        %709 = vmatpush1.msra.mxu0 0.0
        %710 = vmatprep.subr.mxu0 0.0
        %711 = vmatpush1.msra.mxu0 0.0
        %712 = vmatprep.mubr.f32.mxu0 0.0
        %713 = vmatmul.mubr.f32.gmra.mrb[0].mxu0 %v642
        %v714 = vpop.f32.mrb[0].mxu0
        %v715 = vadd.f32 0.0, %v714
        %v716 = vpop.f32.mrb[0].mxu0
        %v717 = vadd.f32 0.0, %v716
        %718 = vdwg.mxu0
        %v719 = vadd.f32 %v637, %v715
        %v720 = vadd.f32 %v638, %v717
        %721 = vrot.lane.b32.xlu0 %v215, 127
        %v722 = vpop.permute.xlu0 %721
        %723 = vrot.lane.b32.xlu0 %v224, 127
        %v724 = vpop.permute.xlu0 %723
        %vm725 = vcmask 1039360
        %v726 = vsel %vm725, %v722, %v724
        %v729 = vsel %vm725, %v724, 0.0
        %v730 = vmul.f32 %v726, %v453
        %v731 = vmul.f32 %v729, %v457
        %s732 = scalar_lea.vmem %s1, 40
        %v733 = vld [vmem:[%s732] sm:$0xff]
        %v735 = vsel %vm256, %v733, 0
        %v738 = vsel %vm260, %v730, 0
        %v741 = vsel %vm260, %v731, 0
        %743 = vmatprep.subr.mxu0 %v741
        %744 = vmatpush1.msra.mxu0 %v738
        %745 = vmatprep.subr.mxu0 0.0
        %746 = vmatpush1.msra.mxu0 0.0
        %747 = vmatprep.subr.mxu0 0.0
        %748 = vmatpush1.msra.mxu0 0.0
        %749 = vmatprep.subr.mxu0 0.0
        %750 = vmatpush1.msra.mxu0 0.0
        %751 = vmatprep.subr.mxu0 0.0
        %752 = vmatpush1.msra.mxu0 0.0
        %753 = vmatprep.subr.mxu0 0.0
        %754 = vmatpush1.msra.mxu0 0.0
        %755 = vmatprep.subr.mxu0 0.0
        %756 = vmatpush1.msra.mxu0 0.0
        %757 = vmatprep.subr.mxu0 0.0
        %758 = vmatpush1.msra.mxu0 0.0
        %759 = vmatprep.subr.mxu0 0.0
        %760 = vmatpush1.msra.mxu0 0.0
        %761 = vmatprep.subr.mxu0 0.0
        %762 = vmatpush1.msra.mxu0 0.0
        %763 = vmatprep.subr.mxu0 0.0
        %764 = vmatpush1.msra.mxu0 0.0
        %765 = vmatprep.subr.mxu0 0.0
        %766 = vmatpush1.msra.mxu0 0.0
        %767 = vmatprep.subr.mxu0 0.0
        %768 = vmatpush1.msra.mxu0 0.0
        %769 = vmatprep.subr.mxu0 0.0
        %770 = vmatpush1.msra.mxu0 0.0
        %771 = vmatprep.subr.mxu0 0.0
        %772 = vmatpush1.msra.mxu0 0.0
        %773 = vmatprep.subr.mxu0 0.0
        %774 = vmatpush1.msra.mxu0 0.0
        %775 = vmatprep.subr.mxu0 0.0
        %776 = vmatpush1.msra.mxu0 0.0
        %777 = vmatprep.subr.mxu0 0.0
        %778 = vmatpush1.msra.mxu0 0.0
        %779 = vmatprep.subr.mxu0 0.0
        %780 = vmatpush1.msra.mxu0 0.0
        %781 = vmatprep.subr.mxu0 0.0
        %782 = vmatpush1.msra.mxu0 0.0
        %783 = vmatprep.subr.mxu0 0.0
        %784 = vmatpush1.msra.mxu0 0.0
        %785 = vmatprep.subr.mxu0 0.0
        %786 = vmatpush1.msra.mxu0 0.0
        %787 = vmatprep.subr.mxu0 0.0
        %788 = vmatpush1.msra.mxu0 0.0
        %789 = vmatprep.subr.mxu0 0.0
        %790 = vmatpush1.msra.mxu0 0.0
        %791 = vmatprep.subr.mxu0 0.0
        %792 = vmatpush1.msra.mxu0 0.0
        %793 = vmatprep.subr.mxu0 0.0
        %794 = vmatpush1.msra.mxu0 0.0
        %795 = vmatprep.subr.mxu0 0.0
        %796 = vmatpush1.msra.mxu0 0.0
        %797 = vmatprep.subr.mxu0 0.0
        %798 = vmatpush1.msra.mxu0 0.0
        %799 = vmatprep.subr.mxu0 0.0
        %800 = vmatpush1.msra.mxu0 0.0
        %801 = vmatprep.subr.mxu0 0.0
        %802 = vmatpush1.msra.mxu0 0.0
        %803 = vmatprep.subr.mxu0 0.0
        %804 = vmatpush1.msra.mxu0 0.0
        %805 = vmatprep.subr.mxu0 0.0
        %806 = vmatpush1.msra.mxu0 0.0
        %807 = vmatprep.mubr.f32.mxu0 0.0
        %808 = vmatmul.mubr.f32.gmra.mrb[0].mxu0 %v735
        %v809 = vpop.f32.mrb[0].mxu0
        %v810 = vadd.f32 0.0, %v809
        %v811 = vpop.f32.mrb[0].mxu0
        %v812 = vadd.f32 0.0, %v811
        %813 = vdwg.mxu0
        %v814 = vadd.f32 %v719, %v810
        %v815 = vadd.f32 %v720, %v812
        %816 = vrot.lane.b32.xlu0 %v215, 113
        %v817 = vpop.permute.xlu0 %816
        %818 = vrot.lane.b32.xlu0 %v224, 113
        %v819 = vpop.permute.xlu0 %818
        %vm820 = vcmask 924672
        %v821 = vsel %vm820, %v817, %v819
        %v824 = vsel %vm820, %v819, 0.0
        %v825 = vmul.f32 %v821, %v248
        %v826 = vmul.f32 %v824, %v252
        %s827 = scalar_lea.vmem %s1, 48
        %v828 = vld [vmem:[%s827] sm:$0xff]
        %v830 = vsel %vm256, %v828, 0
        %v833 = vsel %vm260, %v825, 0
        %v836 = vsel %vm260, %v826, 0
        %838 = vmatprep.subr.mxu0 %v836
        %839 = vmatpush1.msra.mxu0 %v833
        %840 = vmatprep.subr.mxu0 0.0
        %841 = vmatpush1.msra.mxu0 0.0
        %842 = vmatprep.subr.mxu0 0.0
        %843 = vmatpush1.msra.mxu0 0.0
        %844 = vmatprep.subr.mxu0 0.0
        %845 = vmatpush1.msra.mxu0 0.0
        %846 = vmatprep.subr.mxu0 0.0
        %847 = vmatpush1.msra.mxu0 0.0
        %848 = vmatprep.subr.mxu0 0.0
        %849 = vmatpush1.msra.mxu0 0.0
        %850 = vmatprep.subr.mxu0 0.0
        %851 = vmatpush1.msra.mxu0 0.0
        %852 = vmatprep.subr.mxu0 0.0
        %853 = vmatpush1.msra.mxu0 0.0
        %854 = vmatprep.subr.mxu0 0.0
        %855 = vmatpush1.msra.mxu0 0.0
        %856 = vmatprep.subr.mxu0 0.0
        %857 = vmatpush1.msra.mxu0 0.0
        %858 = vmatprep.subr.mxu0 0.0
        %859 = vmatpush1.msra.mxu0 0.0
        %860 = vmatprep.subr.mxu0 0.0
        %861 = vmatpush1.msra.mxu0 0.0
        %862 = vmatprep.subr.mxu0 0.0
        %863 = vmatpush1.msra.mxu0 0.0
        %864 = vmatprep.subr.mxu0 0.0
        %865 = vmatpush1.msra.mxu0 0.0
        %866 = vmatprep.subr.mxu0 0.0
        %867 = vmatpush1.msra.mxu0 0.0
        %868 = vmatprep.subr.mxu0 0.0
        %869 = vmatpush1.msra.mxu0 0.0
        %870 = vmatprep.subr.mxu0 0.0
        %871 = vmatpush1.msra.mxu0 0.0
        %872 = vmatprep.subr.mxu0 0.0
        %873 = vmatpush1.msra.mxu0 0.0
        %874 = vmatprep.subr.mxu0 0.0
        %875 = vmatpush1.msra.mxu0 0.0
        %876 = vmatprep.subr.mxu0 0.0
        %877 = vmatpush1.msra.mxu0 0.0
        %878 = vmatprep.subr.mxu0 0.0
        %879 = vmatpush1.msra.mxu0 0.0
        %880 = vmatprep.subr.mxu0 0.0
        %881 = vmatpush1.msra.mxu0 0.0
        %882 = vmatprep.subr.mxu0 0.0
        %883 = vmatpush1.msra.mxu0 0.0
        %884 = vmatprep.subr.mxu0 0.0
        %885 = vmatpush1.msra.mxu0 0.0
        %886 = vmatprep.subr.mxu0 0.0
        %887 = vmatpush1.msra.mxu0 0.0
        %888 = vmatprep.subr.mxu0 0.0
        %889 = vmatpush1.msra.mxu0 0.0
        %890 = vmatprep.subr.mxu0 0.0
        %891 = vmatpush1.msra.mxu0 0.0
        %892 = vmatprep.subr.mxu0 0.0
        %893 = vmatpush1.msra.mxu0 0.0
        %894 = vmatprep.subr.mxu0 0.0
        %895 = vmatpush1.msra.mxu0 0.0
        %896 = vmatprep.subr.mxu0 0.0
        %897 = vmatpush1.msra.mxu0 0.0
        %898 = vmatprep.subr.mxu0 0.0
        %899 = vmatpush1.msra.mxu0 0.0
        %900 = vmatprep.subr.mxu0 0.0
        %901 = vmatpush1.msra.mxu0 0.0
        %902 = vmatprep.mubr.f32.mxu0 0.0
        %903 = vmatmul.mubr.f32.gmra.mrb[0].mxu0 %v830
        %v904 = vpop.f32.mrb[0].mxu0
        %v905 = vadd.f32 0.0, %v904
        %v906 = vpop.f32.mrb[0].mxu0
        %v907 = vadd.f32 0.0, %v906
        %908 = vdwg.mxu0
        %v909 = vadd.f32 %v814, %v905
        %v910 = vadd.f32 %v815, %v907
        %911 = vrot.lane.b32.xlu0 %v215, 112
        %v912 = vpop.permute.xlu0 %911
        %913 = vrot.lane.b32.xlu0 %v224, 112
        %v914 = vpop.permute.xlu0 %913
        %vm915 = vcmask 916480
        %v916 = vsel %vm915, %v912, %v914
        %v918 = vsel %vm915, %v914, 0.0
        %s919 = scalar_lea.vmem %s1, 56
        %v920 = vld [vmem:[%s919] sm:$0xff]
        %v922 = vsel %vm256, %v920, 0
        %v924 = vsel %vm260, %v916, 0
        %v927 = vsel %vm260, %v918, 0
        %929 = vmatprep.subr.mxu0 %v927
        %930 = vmatpush1.msra.mxu0 %v924
        %931 = vmatprep.subr.mxu0 0.0
        %932 = vmatpush1.msra.mxu0 0.0
        %933 = vmatprep.subr.mxu0 0.0
        %934 = vmatpush1.msra.mxu0 0.0
        %935 = vmatprep.subr.mxu0 0.0
        %936 = vmatpush1.msra.mxu0 0.0
        %937 = vmatprep.subr.mxu0 0.0
        %938 = vmatpush1.msra.mxu0 0.0
        %939 = vmatprep.subr.mxu0 0.0
        %940 = vmatpush1.msra.mxu0 0.0
        %941 = vmatprep.subr.mxu0 0.0
        %942 = vmatpush1.msra.mxu0 0.0
        %943 = vmatprep.subr.mxu0 0.0
        %944 = vmatpush1.msra.mxu0 0.0
        %945 = vmatprep.subr.mxu0 0.0
        %946 = vmatpush1.msra.mxu0 0.0
        %947 = vmatprep.subr.mxu0 0.0
        %948 = vmatpush1.msra.mxu0 0.0
        %949 = vmatprep.subr.mxu0 0.0
        %950 = vmatpush1.msra.mxu0 0.0
        %951 = vmatprep.subr.mxu0 0.0
        %952 = vmatpush1.msra.mxu0 0.0
        %953 = vmatprep.subr.mxu0 0.0
        %954 = vmatpush1.msra.mxu0 0.0
        %955 = vmatprep.subr.mxu0 0.0
        %956 = vmatpush1.msra.mxu0 0.0
        %957 = vmatprep.subr.mxu0 0.0
        %958 = vmatpush1.msra.mxu0 0.0
        %959 = vmatprep.subr.mxu0 0.0
        %960 = vmatpush1.msra.mxu0 0.0
        %961 = vmatprep.subr.mxu0 0.0
        %962 = vmatpush1.msra.mxu0 0.0
        %963 = vmatprep.subr.mxu0 0.0
        %964 = vmatpush1.msra.mxu0 0.0
        %965 = vmatprep.subr.mxu0 0.0
        %966 = vmatpush1.msra.mxu0 0.0
        %967 = vmatprep.subr.mxu0 0.0
        %968 = vmatpush1.msra.mxu0 0.0
        %969 = vmatprep.subr.mxu0 0.0
        %970 = vmatpush1.msra.mxu0 0.0
        %971 = vmatprep.subr.mxu0 0.0
        %972 = vmatpush1.msra.mxu0 0.0
        %973 = vmatprep.subr.mxu0 0.0
        %974 = vmatpush1.msra.mxu0 0.0
        %975 = vmatprep.subr.mxu0 0.0
        %976 = vmatpush1.msra.mxu0 0.0
        %977 = vmatprep.subr.mxu0 0.0
        %978 = vmatpush1.msra.mxu0 0.0
        %979 = vmatprep.subr.mxu0 0.0
        %980 = vmatpush1.msra.mxu0 0.0
        %981 = vmatprep.subr.mxu0 0.0
        %982 = vmatpush1.msra.mxu0 0.0
        %983 = vmatprep.subr.mxu0 0.0
        %984 = vmatpush1.msra.mxu0 0.0
        %985 = vmatprep.subr.mxu0 0.0
        %986 = vmatpush1.msra.mxu0 0.0
        %987 = vmatprep.subr.mxu0 0.0
        %988 = vmatpush1.msra.mxu0 0.0
        %989 = vmatprep.subr.mxu0 0.0
        %990 = vmatpush1.msra.mxu0 0.0
        %991 = vmatprep.subr.mxu0 0.0
        %992 = vmatpush1.msra.mxu0 0.0
        %993 = vmatprep.mubr.f32.mxu0 0.0
        %994 = vmatmul.mubr.f32.gmra.mrb[0].mxu0 %v922
        %v995 = vpop.f32.mrb[0].mxu0
        %v996 = vadd.f32 0.0, %v995
        %v997 = vpop.f32.mrb[0].mxu0
        %v998 = vadd.f32 0.0, %v997
        %999 = vdwg.mxu0
        %v1000 = vadd.f32 %v909, %v996
        %v1001 = vadd.f32 %v910, %v998
        %1002 = vrot.lane.b32.xlu0 %v215, 111
        %v1003 = vpop.permute.xlu0 %1002
        %1004 = vrot.lane.b32.xlu0 %v224, 111
        %v1005 = vpop.permute.xlu0 %1004
        %vm1006 = vcmask 908288
        %v1007 = vsel %vm1006, %v1003, %v1005
        %v1010 = vsel %vm1006, %v1005, 0.0
        %v1011 = vmul.f32 %v1007, %v453
        %v1012 = vmul.f32 %v1010, %v457
        %s1013 = scalar_lea.vmem %s1, 64
        %v1014 = vld [vmem:[%s1013] sm:$0xff]
        %v1016 = vsel %vm256, %v1014, 0
        %v1019 = vsel %vm260, %v1011, 0
        %v1022 = vsel %vm260, %v1012, 0
        %1024 = vmatprep.subr.mxu0 %v1022
        %1025 = vmatpush1.msra.mxu0 %v1019
        %1026 = vmatprep.subr.mxu0 0.0
        %1027 = vmatpush1.msra.mxu0 0.0
        %1028 = vmatprep.subr.mxu0 0.0
        %1029 = vmatpush1.msra.mxu0 0.0
        %1030 = vmatprep.subr.mxu0 0.0
        %1031 = vmatpush1.msra.mxu0 0.0
        %1032 = vmatprep.subr.mxu0 0.0
        %1033 = vmatpush1.msra.mxu0 0.0
        %1034 = vmatprep.subr.mxu0 0.0
        %1035 = vmatpush1.msra.mxu0 0.0
        %1036 = vmatprep.subr.mxu0 0.0
        %1037 = vmatpush1.msra.mxu0 0.0
        %1038 = vmatprep.subr.mxu0 0.0
        %1039 = vmatpush1.msra.mxu0 0.0
        %1040 = vmatprep.subr.mxu0 0.0
        %1041 = vmatpush1.msra.mxu0 0.0
        %1042 = vmatprep.subr.mxu0 0.0
        %1043 = vmatpush1.msra.mxu0 0.0
        %1044 = vmatprep.subr.mxu0 0.0
        %1045 = vmatpush1.msra.mxu0 0.0
        %1046 = vmatprep.subr.mxu0 0.0
        %1047 = vmatpush1.msra.mxu0 0.0
        %1048 = vmatprep.subr.mxu0 0.0
        %1049 = vmatpush1.msra.mxu0 0.0
        %1050 = vmatprep.subr.mxu0 0.0
        %1051 = vmatpush1.msra.mxu0 0.0
        %1052 = vmatprep.subr.mxu0 0.0
        %1053 = vmatpush1.msra.mxu0 0.0
        %1054 = vmatprep.subr.mxu0 0.0
        %1055 = vmatpush1.msra.mxu0 0.0
        %1056 = vmatprep.subr.mxu0 0.0
        %1057 = vmatpush1.msra.mxu0 0.0
        %1058 = vmatprep.subr.mxu0 0.0
        %1059 = vmatpush1.msra.mxu0 0.0
        %1060 = vmatprep.subr.mxu0 0.0
        %1061 = vmatpush1.msra.mxu0 0.0
        %1062 = vmatprep.subr.mxu0 0.0
        %1063 = vmatpush1.msra.mxu0 0.0
        %1064 = vmatprep.subr.mxu0 0.0
        %1065 = vmatpush1.msra.mxu0 0.0
        %1066 = vmatprep.subr.mxu0 0.0
        %1067 = vmatpush1.msra.mxu0 0.0
        %1068 = vmatprep.subr.mxu0 0.0
        %1069 = vmatpush1.msra.mxu0 0.0
        %1070 = vmatprep.subr.mxu0 0.0
        %1071 = vmatpush1.msra.mxu0 0.0
        %1072 = vmatprep.subr.mxu0 0.0
        %1073 = vmatpush1.msra.mxu0 0.0
        %1074 = vmatprep.subr.mxu0 0.0
        %1075 = vmatpush1.msra.mxu0 0.0
        %1076 = vmatprep.subr.mxu0 0.0
        %1077 = vmatpush1.msra.mxu0 0.0
        %1078 = vmatprep.subr.mxu0 0.0
        %1079 = vmatpush1.msra.mxu0 0.0
        %1080 = vmatprep.subr.mxu0 0.0
        %1081 = vmatpush1.msra.mxu0 0.0
        %1082 = vmatprep.subr.mxu0 0.0
        %1083 = vmatpush1.msra.mxu0 0.0
        %1084 = vmatprep.subr.mxu0 0.0
        %1085 = vmatpush1.msra.mxu0 0.0
        %1086 = vmatprep.subr.mxu0 0.0
        %1087 = vmatpush1.msra.mxu0 0.0
        %1088 = vmatprep.mubr.f32.mxu0 0.0
        %1089 = vmatmul.mubr.f32.gmra.mrb[0].mxu0 %v1016
        %v1090 = vpop.f32.mrb[0].mxu0
        %v1091 = vadd.f32 0.0, %v1090
        %v1092 = vpop.f32.mrb[0].mxu0
        %v1093 = vadd.f32 0.0, %v1092
        %1094 = vdwg.mxu0
        %v1095 = vadd.f32 %v1000, %v1091
        %v1096 = vadd.f32 %v1001, %v1093
        %v1097 = vxor.u32 %v1095, 2147483648
        %v1098 = vxor.u32 %v1096, 2147483648
        %v1099 = vmul.f32 %v1097, 1.442695
        %v1100 = vpow.pop %v1099
        %v1101 = vmul.f32 %v1098, 1.442695
        %v1102 = vpow.pop %v1101
        %v1103 = vadd.f32 %v1100, 1.0
        %v1104 = vadd.f32 %v1102, 1.0
        %v1105 = vrcp.pop %v1103
        %v1106 = vmul.f32 1.0, %v1105
        %v1107 = vrcp.pop %v1104
        %v1108 = vmul.f32 1.0, %v1107
        %v1109 = vtanh.pop %v1095
        %v1110 = vtanh.pop %v1096
        %v1113 = vrot.slane %v1109, 4
        %v1114 = vrot.slane %v1110, 4
        %v1117 = vmul.f32 %v1106, %v1113
        %v1118 = vmul.f32 %v1108, %v1114
        %v1121 = vcombine.low %v1117, %v1118
        %1123 = vst [vmem:[%s214] sm:$0xff] %v1121
        %s1124 = sand.u32 %s118, 1
        %s1125 = scalar_lea.sflag [#allocation4], %s1124
        %s1126 = sand.u32 %s118, 1
        %s1127 = smul.addr %s1126, 8
        %s1128 = scalar_lea.vmem [#allocation5], %s1127
        // Predicated region
        $region41: #{tpu_custom_call.1} parent=35 // pred_check
          %p1129 = pneg %p128
        $region42: #{tpu_custom_call.1} parent=35 // pred_check_branch
          %1131 = sbr.rel (%p1129) target = $region44
        $region43: #{tpu_custom_call.1} parent=35 // pred_region
          %s1133 = ssub.s32 128, 128
          %1134 = vsyncadd %s1125, %s1133
          %s1135 = smul.addr %s21, 4
          %s1136 = sadd.s32 2, %s1135
          %s1137 = smul.addr %s1136, 64
          %s1138 = scalar_lea.hbm %s4, %s1137
          %s1140 = sshll.u32 %s1128, 4
          %s1141 = int_to_ptr.vmem [resolvable:$true] %s1140
          %1143 = dma.vmem_to_hbm [thread:$0]  %s1141, 128, %s1138, %s1125
        $region44: #{tpu_custom_call.1} parent=35 // pred_fallthru
          _
      $region36: #{tpu_custom_call.1} parent=5 // pred_fallthru
        _
      %p1144 = scmp.le.s32.totalorder 2, %s16
      // Predicated region
      $region45: #{tpu_custom_call.1} parent=5 // pred_check
        %p1145 = pneg %p1144
      $region46: #{tpu_custom_call.1} parent=5 // pred_check_branch
        %1147 = sbr.rel (%p1145) target = $region48
      $region47: #{tpu_custom_call.1} parent=5 // pred_region
        %s1148 = ssub.s32 %s16, 2
        // Predicated region
        $region49: #{tpu_custom_call.1} parent=47 // pred_check
          %p1149 = pneg %p134
        $region50: #{tpu_custom_call.1} parent=47 // pred_check_branch
          %1151 = sbr.rel (%p1149) target = $region52
        $region51: #{tpu_custom_call.1} parent=47 // pred_region
          %s1152 = sand.u32 %s119, 1
          %s1153 = scalar_lea.sflag [#allocation4], %s1152
          %s1154 = sand.u32 %s119, 1
          %s1155 = smul.addr %s1154, 8
          %s1156 = scalar_lea.vmem [#allocation5], %s1155
          %1157 = dma.done %s1153, 128
        $region52: #{tpu_custom_call.1} parent=47 // pred_fallthru
          _
      $region48: #{tpu_custom_call.1} parent=5 // pred_fallthru
        _
    $region6: #{tpu_custom_call.1} parent=1 // loop_footer
      %s20 = sadd.s32 1, %s16
    $region7: #{tpu_custom_call.1} parent=1 // loop_footer_branch
      %15 = sbr.rel target = $region3
    $region8: #{tpu_custom_call.1} parent=1 // loop_exit
      _
    %1158 = vsyncpa [#allocation3], 1
    %s1159 = scalar_lea.sflag [#allocation3], 1
    %1160 = vsyncpa %s1159, 1
    %1161 = vsyncpa [#allocation4], 1
    %s1162 = scalar_lea.sflag [#allocation4], 1
    %1163 = vsyncpa %s1162, 1

</llo_original>
